<compile_context>
chip_gen: v7x
topology: tpu7x:2x2x1
jax: 0.10.0
libtpu: 0.0.40
codegen_flags: <defaults>
</compile_context>

<pallas_src>
import functools
import math

import jax
import jax.numpy as jnp
from jax.experimental import pallas as pl
from jax.experimental.pallas import tpu as pltpu


_LANE = 128
_TARGET_TILE_BYTES = 512 * 1024       # ~85% of HBM roofline per measured sweep
_PER_TILE_BUDGET = 2 * 1024 * 1024    # ~8 live double-buffered tiles -> <=16 MiB VMEM
_VMEM_LIMIT = 32 * 1024 * 1024        # explicit scoped limit, safe on v5e/v6e/v7x


def _min_sublane(itemsizes):
    sz = min(itemsizes)
    if sz >= 4:
        return 8
    if sz == 2:
        return 16
    return 32


# ----------------------------------------------------------------------------
# Tiled, pipelined kernel (lane-aligned concat seam)
# ----------------------------------------------------------------------------
def _tiled_kernel(n1, x_ref, w0_ref, w1_ref, t2_ref, o_ref):
    # x_ref / w0_ref : (TB, TD) candidate source tiles; only one is read.
    # w1_ref         : (TB, TD) bias tile of the concatenated width.
    # t2_ref         : (TB, 1)  tanh(w2), hoisted, f32, broadcast over lanes.
    # o_ref          : (TB, TD)
    j = pl.program_id(1)                       # feature-tile index
    w1 = w1_ref[...].astype(jnp.float32)
    t2 = t2_ref[...]                           # already f32

    @pl.when(j < n1)                           # x segment
    def _():
        y = x_ref[...].astype(jnp.float32) + w1
        o_ref[...] = (jnp.tanh(y) + t2).astype(o_ref.dtype)

    @pl.when(j >= n1)                          # w0 segment
    def _():
        y = w0_ref[...].astype(jnp.float32) + w1
        o_ref[...] = (jnp.tanh(y) + t2).astype(o_ref.dtype)


def _pick_tiles(B, D1, D2, itemsizes):
    """Return (TB, TD) for the lane-aligned tiled path, or None if not applicable."""
    if D1 <= 0 or D2 <= 0 or (D1 % _LANE) or (D2 % _LANE):
        return None
    min_sub = _min_sublane(itemsizes)
    if B <= 0 or B % min_sub:
        return None
    g = math.gcd(D1, D2)
    D = D1 + D2
    isz = max(itemsizes)

    td_cands = [t for t in range(_LANE, g + 1, _LANE) if g % t == 0]
    tb_cands = [t for t in range(min_sub, B + 1, min_sub) if B % t == 0]

    best, best_score = None, None
    for td in td_cands:
        for tb in tb_cands:
            tile_bytes = tb * td * isz
            if tile_bytes > _PER_TILE_BUDGET:
                continue
            grid_r = B // tb
            grid_c = D // td
            score = (
                min(tile_bytes, _TARGET_TILE_BYTES),   # amortize per-step overhead first
                1 if grid_r % 2 == 0 else 0,           # even batch extent: v7x megacore
                1 if grid_c % 2 == 0 else 0,
                tile_bytes,                            # then fewest steps
            )
            if best_score is None or score > best_score:
                best_score, best = score, (tb, td)
    return best


# ----------------------------------------------------------------------------
# Batch-tiled fallback for awkward (non-128-aligned) widths.
# ----------------------------------------------------------------------------
def _fallback_kernel(x_ref, w0_ref, w1a_ref, w1b_ref, t2_ref, o1_ref, o2_ref):
    t2 = t2_ref[...]                           # f32
    y1 = x_ref[...].astype(jnp.float32) + w1a_ref[...].astype(jnp.float32)
    o1_ref[...] = (jnp.tanh(y1) + t2).astype(o1_ref.dtype)
    y2 = w0_ref[...].astype(jnp.float32) + w1b_ref[...].astype(jnp.float32)
    o2_ref[...] = (jnp.tanh(y2) + t2).astype(o2_ref.dtype)


def _fallback(x2, w0f, w1f, t2, out_dtype):
    B, D1 = x2.shape
    D2 = w0f.shape[1]
    itemsizes = [jnp.dtype(a.dtype).itemsize for a in (x2, w0f, w1f)]
    itemsizes.append(jnp.dtype(out_dtype).itemsize)
    min_sub = _min_sublane(itemsizes)

    # Tile over the batch axis so VMEM stays bounded for large unaligned shapes.
    row_bytes = (3 * (D1 + D2) + 1) * max(itemsizes)
    if B % min_sub == 0:
        cap = max(min_sub, (8 * 1024 * 1024) // max(row_bytes, 1))
        cap = min(cap, B)
        cap -= cap % min_sub
        tb = min_sub
        for t in range(max(cap, min_sub), min_sub - 1, -min_sub):
            if B % t == 0:
                tb = t
                break
    else:
        tb = B        # awkward batch: single full-height block (small shapes only)
    grid = (B // tb,)

    w1a = w1f[:, :D1]
    w1b = w1f[:, D1:]
    o1, o2 = pl.pallas_call(
        _fallback_kernel,
        out_shape=(jax.ShapeDtypeStruct((B, D1), out_dtype),
                   jax.ShapeDtypeStruct((B, D2), out_dtype)),
        grid_spec=pltpu.PrefetchScalarGridSpec(
            num_scalar_prefetch=0,
            grid=grid,
            in_specs=[
                pl.BlockSpec((tb, D1), lambda i: (i, 0)),
                pl.BlockSpec((tb, D2), lambda i: (i, 0)),
                pl.BlockSpec((tb, D1), lambda i: (i, 0)),
                pl.BlockSpec((tb, D2), lambda i: (i, 0)),
                pl.BlockSpec((tb, 1), lambda i: (i, 0)),
            ],
            out_specs=(pl.BlockSpec((tb, D1), lambda i: (i, 0)),
                       pl.BlockSpec((tb, D2), lambda i: (i, 0))),
        ),
        compiler_params=pltpu.CompilerParams(
            dimension_semantics=("parallel",),
            vmem_limit_bytes=_VMEM_LIMIT,
        ),
    )(x2, w0f, w1a, w1b, t2)
    # TODO(synk): unaligned seam still costs one extra output pass via this concat.
    return jnp.concatenate([o1, o2], axis=1)


# ----------------------------------------------------------------------------
# Public entry point
# ----------------------------------------------------------------------------
def model_forward(x, w0, w1, w2):
    """x: (B, ...) ; w0: (B, ...) ; w1: (B, D, 1, 1) with D = D1 + D2 ; w2: (B,)."""
    B = x.shape[0]
    out_dtype = jnp.result_type(x.dtype, w0.dtype, w1.dtype, w2.dtype)

    # Keep original dtypes (no wrapper convert passes); cast to f32 in-kernel.
    x2 = x.reshape(B, -1)
    w0f = w0.reshape(B, -1)
    w1f = w1.reshape(B, -1)
    # Hoist tanh(w2): only B elements; computed in f32, reused across feature tiles.
    t2 = jnp.tanh(w2.reshape(B, 1).astype(jnp.float32))

    D1 = x2.shape[1]
    D2 = w0f.shape[1]
    D = D1 + D2
    assert w1f.shape[1] == D, "w1 flattened size must match concat width"

    itemsizes = [jnp.dtype(a.dtype).itemsize for a in (x2, w0f, w1f)]
    itemsizes.append(jnp.dtype(out_dtype).itemsize)

    tiles = _pick_tiles(B, D1, D2, itemsizes)
    if tiles is None:
        return _fallback(x2, w0f, w1f, t2, out_dtype)

    TB, TD = tiles
    n1 = D1 // TD                    # number of feature tiles in the x segment
    grid = (B // TB, D // TD)        # feature axis innermost so clamped DMAs are skipped

    return pl.pallas_call(
        functools.partial(_tiled_kernel, n1),
        out_shape=jax.ShapeDtypeStruct((B, D), out_dtype),
        grid_spec=pltpu.PrefetchScalarGridSpec(
            num_scalar_prefetch=0,
            grid=grid,
            in_specs=[
                # Clamp the dead segment's block index so it does not re-DMA.
                pl.BlockSpec((TB, TD), lambda i, j: (i, jnp.minimum(j, n1 - 1))),
                pl.BlockSpec((TB, TD), lambda i, j: (i, jnp.maximum(j - n1, 0))),
                pl.BlockSpec((TB, TD), lambda i, j: (i, j)),
                pl.BlockSpec((TB, 1), lambda i, j: (i, 0)),
            ],
            out_specs=pl.BlockSpec((TB, TD), lambda i, j: (i, j)),
        ),
        compiler_params=pltpu.CompilerParams(
            dimension_semantics=("parallel", "parallel"),
            vmem_limit_bytes=_VMEM_LIMIT,
        ),
    )(x2, w0f, w1f, t2)


# ----------------------------------------------------------------------------
# Pure-JAX reference
# ----------------------------------------------------------------------------
def _reference(x, w0, w1, w2):
    B = x.shape[0]
    y = jnp.concatenate([x.reshape(B, -1), w0.reshape(B, -1)], axis=1)
    y = y + w1.reshape(B, -1)
    return jnp.tanh(y) + jnp.tanh(w2.reshape(B, -1))


if __name__ == "__main__":
    key = jax.random.PRNGKey(0)
    k0, k1, k2, k3 = jax.random.split(key, 4)

    # --- Test 1: lane-aligned shapes -> tiled, pipelined path ---------------
    # B=16; x (16,2,16,16) -> D1=512; w0 (16,4,8,8) -> D2=256;
    # w1 (16,768,1,1) -> D=768; w2 (16,)  =>  TD=256, seam on a tile boundary.
    B = 16
    x = jax.random.normal(k0, (B, 2, 16, 16), dtype=jnp.float32)
    w0 = jax.random.normal(k1, (B, 4, 8, 8), dtype=jnp.float32)
    w1 = jax.random.normal(k2, (B, 768, 1, 1), dtype=jnp.float32)
    w2 = jax.random.normal(k3, (B,), dtype=jnp.float32)

    out = jax.block_until_ready(model_forward(x, w0, w1, w2))
    ref = _reference(x, w0, w1, w2)
    assert out.shape == ref.shape
    assert jnp.allclose(out, ref, atol=1e-5, rtol=1e-5)

    # --- Test 2: non-aligned shapes -> batch-tiled fallback path ------------
    B2 = 4
    x_b = jax.random.normal(k0, (B2, 3, 5, 5), dtype=jnp.float32)    # D1 = 75
    w0_b = jax.random.normal(k1, (B2, 2, 3, 3), dtype=jnp.float32)   # D2 = 18
    w1_b = jax.random.normal(k2, (B2, 93, 1, 1), dtype=jnp.float32)  # D  = 93
    w2_b = jax.random.normal(k3, (B2,), dtype=jnp.float32)

    out_b = jax.block_until_ready(model_forward(x_b, w0_b, w1_b, w2_b))
    ref_b = _reference(x_b, w0_b, w1_b, w2_b)
    assert out_b.shape == ref_b.shape
    assert jnp.allclose(out_b, ref_b, atol=1e-5, rtol=1e-5)

    # --- Test 3: mixed dtype (bf16 x) + large gcd -> TD > 512, no wrapper cast
    x_c = jax.random.normal(k0, (B, 8, 16, 16), dtype=jnp.bfloat16)   # D1 = 2048
    w0_c = jax.random.normal(k1, (B, 16, 8, 8), dtype=jnp.float32)    # D2 = 1024
    w1_c = jax.random.normal(k2, (B, 3072, 1, 1), dtype=jnp.float32)  # D  = 3072
    w2_c = jax.random.normal(k3, (B,), dtype=jnp.float32)

    out_c = jax.block_until_ready(model_forward(x_c, w0_c, w1_c, w2_c))
    ref_c = _reference(x_c, w0_c, w1_c, w2_c)
    assert out_c.shape == ref_c.shape
    assert out_c.dtype == ref_c.dtype
    assert jnp.allclose(out_c, ref_c, atol=1e-5, rtol=1e-5)

    print("KERNEL_OK")
</pallas_src>

<mosaic_0001>
module attributes {stable_mosaic.version = 11 : i64} {
  func.func @_tiled_kernel(%arg0: i32, %arg1: i32, %arg2: memref<16x256xf32, #tpu.memory_space<vmem>>, %arg3: memref<16x256xf32, #tpu.memory_space<vmem>>, %arg4: memref<16x256xf32, #tpu.memory_space<vmem>>, %arg5: memref<16x1xf32, #tpu.memory_space<vmem>>, %arg6: memref<16x256xf32, #tpu.memory_space<vmem>>) attributes {dimension_semantics = [#tpu.dimension_semantics<parallel>, #tpu.dimension_semantics<parallel>], iteration_bounds = array<i64: 1, 3>, scalar_prefetch = 0 : i64, scratch_operands = 0 : i64, tpu.core_type = #tpu.core_type<tc>, window_params = [{transform_indices = @transform_0, window_bounds = array<i64: 16, 256>}, {transform_indices = @transform_1, window_bounds = array<i64: 16, 256>}, {transform_indices = @transform_2, window_bounds = array<i64: 16, 256>}, {transform_indices = @transform_3, window_bounds = array<i64: 16, 1>}, {transform_indices = @transform_4, window_bounds = array<i64: 16, 256>}]} {
    %c0 = arith.constant 0 : index
    %c0_0 = arith.constant 0 : index
    %0 = vector.load %arg4[%c0, %c0_0] : memref<16x256xf32, #tpu.memory_space<vmem>>, vector<16x256xf32>
    %c0_1 = arith.constant 0 : index
    %c0_2 = arith.constant 0 : index
    %1 = vector.load %arg5[%c0_1, %c0_2] : memref<16x1xf32, #tpu.memory_space<vmem>>, vector<16x1xf32>
    %c2_i32 = arith.constant 2 : i32
    %2 = arith.cmpi slt, %arg1, %c2_i32 : i32
    %3 = arith.extui %2 : i1 to i32
    %c0_i32 = arith.constant 0 : i32
    %4 = arith.cmpi ne, %3, %c0_i32 : i32
    scf.if %4 {
      %c0_5 = arith.constant 0 : index
      %c0_6 = arith.constant 0 : index
      %8 = vector.load %arg2[%c0_5, %c0_6] : memref<16x256xf32, #tpu.memory_space<vmem>>, vector<16x256xf32>
      %9 = arith.addf %8, %0 : vector<16x256xf32>
      %10 = math.tanh %9 : vector<16x256xf32>
      %11 = vector.broadcast %1 : vector<16x1xf32> to vector<16x256xf32>
      %12 = arith.addf %10, %11 : vector<16x256xf32>
      %c0_7 = arith.constant 0 : index
      %c0_8 = arith.constant 0 : index
      %13 = vector.load %arg6[%c0_7, %c0_8] : memref<16x256xf32, #tpu.memory_space<vmem>>, vector<16x256xf32>
      tpu.vector_store %arg6[%c0_7, %c0_8], %12 {strides = array<i32>} : memref<16x256xf32, #tpu.memory_space<vmem>>, vector<16x256xf32>,
    } else {
    }
    %c2_i32_3 = arith.constant 2 : i32
    %5 = arith.cmpi sge, %arg1, %c2_i32_3 : i32
    %6 = arith.extui %5 : i1 to i32
    %c0_i32_4 = arith.constant 0 : i32
    %7 = arith.cmpi ne, %6, %c0_i32_4 : i32
    scf.if %7 {
      %c0_5 = arith.constant 0 : index
      %c0_6 = arith.constant 0 : index
      %8 = vector.load %arg3[%c0_5, %c0_6] : memref<16x256xf32, #tpu.memory_space<vmem>>, vector<16x256xf32>
      %9 = arith.addf %8, %0 : vector<16x256xf32>
      %10 = math.tanh %9 : vector<16x256xf32>
      %11 = vector.broadcast %1 : vector<16x1xf32> to vector<16x256xf32>
      %12 = arith.addf %10, %11 : vector<16x256xf32>
      %c0_7 = arith.constant 0 : index
      %c0_8 = arith.constant 0 : index
      %13 = vector.load %arg6[%c0_7, %c0_8] : memref<16x256xf32, #tpu.memory_space<vmem>>, vector<16x256xf32>
      tpu.vector_store %arg6[%c0_7, %c0_8], %12 {strides = array<i32>} : memref<16x256xf32, #tpu.memory_space<vmem>>, vector<16x256xf32>,
    } else {
    }
    return
  }
  func.func @transform_0(%arg0: i32, %arg1: i32) -> (i32, i32) {
    %c1_i32 = arith.constant 1 : i32
    %0 = arith.minsi %arg1, %c1_i32 : i32
    %c0_i32 = arith.constant 0 : i32
    return %arg0, %0 : i32, i32
  }
  func.func @transform_1(%arg0: i32, %arg1: i32) -> (i32, i32) {
    %c2_i32 = arith.constant 2 : i32
    %0 = arith.subi %arg1, %c2_i32 : i32
    %c0_i32 = arith.constant 0 : i32
    %1 = arith.maxsi %0, %c0_i32 : i32
    %c0_i32_0 = arith.constant 0 : i32
    return %arg0, %1 : i32, i32
  }
  func.func @transform_2(%arg0: i32, %arg1: i32) -> (i32, i32) {
    %c0_i32 = arith.constant 0 : i32
    return %arg0, %arg1 : i32, i32
  }
  func.func @transform_3(%arg0: i32, %arg1: i32) -> (i32, i32) {
    %c0_i32 = arith.constant 0 : i32
    %c0_i32_0 = arith.constant 0 : i32
    return %arg0, %c0_i32 : i32, i32
  }
  func.func @transform_4(%arg0: i32, %arg1: i32) -> (i32, i32) {
    %c0_i32 = arith.constant 0 : i32
    return %arg0, %arg1 : i32, i32
  }
}

</mosaic_0001>

<llo_original>
// kernel: tpu_custom_call.1
$region0: #{tpu_custom_call.1}
  #allocation0 [shape = 'u32[]', space=smem, size = 0x4, offset = 0x4, fixed_abs, tag = 'smem constant byte address 0x4 - core index']
  #allocation1 [shape = 'u32[144,128]{1,0:T(1,128)}', space=vmem, size = 0x12000, scoped, tag = 'internal scratch']
  %s0 = inlined_call_operand.hbm [shape: f32[16,512], index: 0, kind: input, shape index: {}]
  %s1 = inlined_call_operand.hbm [shape: f32[16,256], index: 1, kind: input, shape index: {}]
  %s2 = inlined_call_operand.hbm [shape: f32[16,768], index: 2, kind: input, shape index: {}]
  %s3 = inlined_call_operand.vmem [shape: f32[16,1], index: 3, kind: input, shape index: {}]
  %s4 = inlined_call_operand.hbm [shape: f32[16,768], index: 4, kind: output, shape index: {}]
  %s5 = sld [smem:[#allocation0]]
  $region69: #{tpu_custom_call.1} parent=0
    _
  %s7 = ssub.s32 1, %s5
  %s8 = scalar_select 0, %s7, %s5
  $region1: #{tpu_custom_call.1} parent=0
    #allocation2 [shape = 'u8[32768]{0}', space=vmem, size = 0x8000, scoped, tag = 'input window, operand 0']
    #allocation3 [shape = 's32[2]{0}', space=sflag, size = 0x8, scoped, tag = 'scoped memory for tpu_custom_call.1']
    #allocation4 [shape = 's32[2]{0}', space=sflag, size = 0x8, scoped, tag = 'scoped memory for tpu_custom_call.1']
    #allocation5 [shape = 'u8[32768]{0}', space=vmem, size = 0x8000, scoped, tag = 'input window, operand 1']
    #allocation6 [shape = 's32[2]{0}', space=sflag, size = 0x8, scoped, tag = 'scoped memory for tpu_custom_call.1']
    #allocation7 [shape = 'u8[32768]{0}', space=vmem, size = 0x8000, scoped, tag = 'input window, operand 2']
    #allocation8 [shape = 'u8[32768]{0}', space=vmem, size = 0x8000, scoped, tag = 'output window, operand 0']
    %9 = vsyncpa [#allocation3], 0
    %s10 = scalar_lea.sflag [#allocation3], 1
    %11 = vsyncpa %s10, 0
    %12 = vsyncpa [#allocation6], 0
    %s13 = scalar_lea.sflag [#allocation6], 1
    %14 = vsyncpa %s13, 0
    %15 = vsyncpa [#allocation4], 0
    %s16 = scalar_lea.sflag [#allocation4], 1
    %17 = vsyncpa %s16, 0
    loop: start=0, step=1, limit=5
    $region2: #{tpu_custom_call.1} parent=1 // loop_pre_header
      _
    $region3: #{tpu_custom_call.1} parent=1 // loop_header
      %s19 = sphi 0, %s23
      %p20 = scmp.ge.s32.totalorder %s19, 5
      %s26 = sphi 0, %s38
      %s27 = sphi 0, %s34
      %s28 = sphi 0, %s26
      %s29 = sphi 0, %s27
      %s30 = sphi 0, %s28
      %s31 = sphi 0, %s29
      %s47 = sphi 0, %s49
      %s50 = sphi 0, %s47
      %s51 = sphi 0, %s50
      %s67 = sphi 0, %s51
      %s81 = sphi 0, %s83
      %s84 = sphi 0, %s81
      %s85 = sphi 0, %s84
      %s101 = sphi 0, %s85
      %s109 = sphi 0, %s111
      %s112 = sphi 0, %s109
      %s113 = sphi 0, %s112
      %s129 = sphi 0, %s113
      %s135 = sphi 0, %s137
      %s138 = sphi 0, %s135
      %s139 = sphi 0, %s138
      %s155 = sphi 0, %s139
      %s163 = sphi 0, %s165
      %s166 = sphi 0, %s163
      %s167 = sphi 0, %s166
      %s183 = sphi 0, %s167
    $region4: #{tpu_custom_call.1} parent=1 // loop_header_branch
      %22 = sbr.rel (%p20) target = $region8
    $region5: #{tpu_custom_call.1} parent=1 // loop_body
      %s24 = ssub.s32 %s19, 1
      %s25 = ssub.s32 %s19, 2
      %s32 = sadd.s32 1, %s27
      %p33 = scmp.ge.s32.totalorder %s32, 3
      %s34 = scalar_select %p33, 0, %s32
      %s35 = sadd.s32 1, %s26
      %s36 = scalar_select %p33, %s35, %s26
      %p37 = scmp.ge.s32.totalorder %s36, 1
      %s38 = scalar_select %p37, 0, %s36
      %p39 = scmp.lt.s32.totalorder %s27, 1
      %s40 = scalar_select %p39, %s27, 1
      %p41 = scmp.lt.s32.totalorder %s34, 1
      %s42 = scalar_select %p41, %s34, 1
      %s43 = ssub.s32 %s26, %s38
      %s44 = ssub.s32 %s40, %s42
      %s45 = sor.u32 %s43, %s44
      %p46 = scmp.eq.s32.totalorder %s45, 0
      %s48 = sadd.s32 %s47, 1
      %s49 = scalar_select %p46, %s47, %s48
      %p52 = pneg %p46
      %p53 = scmp.eq.s32.totalorder %s19, 2
      %p54 = por %p52, %p53
      %p55 = scmp.ne.s32.totalorder %s47, %s50
      %p56 = scmp.eq.s32.totalorder %s19, 0
      %p57 = por %p55, %p56
      %p58 = scmp.ne.s32.totalorder %s47, %s50
      %p59 = scmp.eq.s32.totalorder %s24, 2
      %p60 = por %p58, %p59
      %p61 = scmp.ne.s32.totalorder %s50, %s51
      %p62 = scmp.eq.s32.totalorder %s24, 0
      %p63 = por %p61, %p62
      %p64 = scmp.ne.s32.totalorder %s50, %s51
      %p65 = scmp.eq.s32.totalorder %s25, 2
      %p66 = por %p64, %p65
      %p68 = scmp.ne.s32.totalorder %s51, %s67
      %p69 = scmp.eq.s32.totalorder %s25, 0
      %p70 = por %p68, %p69
      %s71 = ssub.s32 %s27, 2
      %p72 = scmp.gt.s32.totalorder %s71, 0
      %s73 = scalar_select %p72, %s71, 0
      %s74 = ssub.s32 %s34, 2
      %p75 = scmp.gt.s32.totalorder %s74, 0
      %s76 = scalar_select %p75, %s74, 0
      %s77 = ssub.s32 %s26, %s38
      %s78 = ssub.s32 %s73, %s76
      %s79 = sor.u32 %s77, %s78
      %p80 = scmp.eq.s32.totalorder %s79, 0
      %s82 = sadd.s32 %s81, 1
      %s83 = scalar_select %p80, %s81, %s82
      %p86 = pneg %p80
      %p87 = scmp.eq.s32.totalorder %s19, 2
      %p88 = por %p86, %p87
      %p89 = scmp.ne.s32.totalorder %s81, %s84
      %p90 = scmp.eq.s32.totalorder %s19, 0
      %p91 = por %p89, %p90
      %p92 = scmp.ne.s32.totalorder %s81, %s84
      %p93 = scmp.eq.s32.totalorder %s24, 2
      %p94 = por %p92, %p93
      %p95 = scmp.ne.s32.totalorder %s84, %s85
      %p96 = scmp.eq.s32.totalorder %s24, 0
      %p97 = por %p95, %p96
      %p98 = scmp.ne.s32.totalorder %s84, %s85
      %p99 = scmp.eq.s32.totalorder %s25, 2
      %p100 = por %p98, %p99
      %p102 = scmp.ne.s32.totalorder %s85, %s101
      %p103 = scmp.eq.s32.totalorder %s25, 0
      %p104 = por %p102, %p103
      %s105 = ssub.s32 %s26, %s38
      %s106 = ssub.s32 %s27, %s34
      %s107 = sor.u32 %s105, %s106
      %p108 = scmp.eq.s32.totalorder %s107, 0
      %s110 = sadd.s32 %s109, 1
      %s111 = scalar_select %p108, %s109, %s110
      %p114 = pneg %p108
      %p115 = scmp.eq.s32.totalorder %s19, 2
      %p116 = por %p114, %p115
      %p117 = scmp.ne.s32.totalorder %s109, %s112
      %p118 = scmp.eq.s32.totalorder %s19, 0
      %p119 = por %p117, %p118
      %p120 = scmp.ne.s32.totalorder %s109, %s112
      %p121 = scmp.eq.s32.totalorder %s24, 2
      %p122 = por %p120, %p121
      %p123 = scmp.ne.s32.totalorder %s112, %s113
      %p124 = scmp.eq.s32.totalorder %s24, 0
      %p125 = por %p123, %p124
      %p126 = scmp.ne.s32.totalorder %s112, %s113
      %p127 = scmp.eq.s32.totalorder %s25, 2
      %p128 = por %p126, %p127
      %p130 = scmp.ne.s32.totalorder %s113, %s129
      %p131 = scmp.eq.s32.totalorder %s25, 0
      %p132 = por %p130, %p131
      %s133 = ssub.s32 %s26, %s38
      %p134 = scmp.eq.s32.totalorder %s133, 0
      %s136 = sadd.s32 %s135, 1
      %s137 = scalar_select %p134, %s135, %s136
      %p140 = pneg %p134
      %p141 = scmp.eq.s32.totalorder %s19, 2
      %p142 = por %p140, %p141
      %p143 = scmp.ne.s32.totalorder %s135, %s138
      %p144 = scmp.eq.s32.totalorder %s19, 0
      %p145 = por %p143, %p144
      %p146 = scmp.ne.s32.totalorder %s135, %s138
      %p147 = scmp.eq.s32.totalorder %s24, 2
      %p148 = por %p146, %p147
      %p149 = scmp.ne.s32.totalorder %s138, %s139
      %p150 = scmp.eq.s32.totalorder %s24, 0
      %p151 = por %p149, %p150
      %p152 = scmp.ne.s32.totalorder %s138, %s139
      %p153 = scmp.eq.s32.totalorder %s25, 2
      %p154 = por %p152, %p153
      %p156 = scmp.ne.s32.totalorder %s139, %s155
      %p157 = scmp.eq.s32.totalorder %s25, 0
      %p158 = por %p156, %p157
      %s159 = ssub.s32 %s26, %s38
      %s160 = ssub.s32 %s27, %s34
      %s161 = sor.u32 %s159, %s160
      %p162 = scmp.eq.s32.totalorder %s161, 0
      %s164 = sadd.s32 %s163, 1
      %s165 = scalar_select %p162, %s163, %s164
      %p168 = pneg %p162
      %p169 = scmp.eq.s32.totalorder %s19, 2
      %p170 = por %p168, %p169
      %p171 = scmp.ne.s32.totalorder %s163, %s166
      %p172 = scmp.eq.s32.totalorder %s19, 0
      %p173 = por %p171, %p172
      %p174 = scmp.ne.s32.totalorder %s163, %s166
      %p175 = scmp.eq.s32.totalorder %s24, 2
      %p176 = por %p174, %p175
      %p177 = scmp.ne.s32.totalorder %s166, %s167
      %p178 = scmp.eq.s32.totalorder %s24, 0
      %p179 = por %p177, %p178
      %p180 = scmp.ne.s32.totalorder %s166, %s167
      %p181 = scmp.eq.s32.totalorder %s25, 2
      %p182 = por %p180, %p181
      %p184 = scmp.ne.s32.totalorder %s167, %s183
      %p185 = scmp.eq.s32.totalorder %s25, 0
      %p186 = por %p184, %p185
      %p187 = scmp.le.s32.totalorder 1, %s19
      %p188 = scmp.lt.s32.totalorder %s19, 4
      %p189 = pnand %p187, %p188
      %p190 = pneg %p189
      // Predicated region
      $region9: #{tpu_custom_call.1} parent=5 // pred_check
        _
      $region10: #{tpu_custom_call.1} parent=5 // pred_check_branch
        %192 = sbr.rel (%p189) target = $region12
      $region11: #{tpu_custom_call.1} parent=5 // pred_region
        %s193 = ssub.s32 %s19, 1
        // Predicated region
        $region13: #{tpu_custom_call.1} parent=11 // pred_check
          %p194 = pneg %p151
        $region14: #{tpu_custom_call.1} parent=11 // pred_check_branch
          %196 = sbr.rel (%p194) target = $region16
        $region15: #{tpu_custom_call.1} parent=11 // pred_region
          %s197 = smul.u32 2, %s28
          %p198 = scmp.lt.s32.totalorder %s197, 1
          %s199 = scalar_select %p198, %s197, 1
          %s200 = smul.addr %s199, 8
          %s201 = scalar_lea.vmem %s3, %s200
          %s202 = smul.u32 2, %s28
        $region16: #{tpu_custom_call.1} parent=11 // pred_fallthru
          _
      $region12: #{tpu_custom_call.1} parent=5 // pred_fallthru
        _
      %p203 = scmp.lt.s32.totalorder %s19, 3
      // Predicated region
      $region17: #{tpu_custom_call.1} parent=5 // pred_check
        %p204 = pneg %p203
      $region18: #{tpu_custom_call.1} parent=5 // pred_check_branch
        %206 = sbr.rel (%p204) target = $region20
      $region19: #{tpu_custom_call.1} parent=5 // pred_region
        // Predicated region
        $region21: #{tpu_custom_call.1} parent=19 // pred_check
          %p207 = pneg %p57
        $region22: #{tpu_custom_call.1} parent=19 // pred_check_branch
          %209 = sbr.rel (%p207) target = $region24
        $region23: #{tpu_custom_call.1} parent=19 // pred_region
          %s210 = sand.u32 %s47, 1
          %s211 = scalar_lea.sflag [#allocation3], %s210
          %s212 = sand.u32 %s47, 1
          %s213 = smul.addr %s212, 32
          %s214 = scalar_lea.vmem [#allocation2], %s213
          %p215 = scmp.lt.s32.totalorder %s27, 1
          %s216 = scalar_select %p215, %s27, 1
          %s217 = smul.u32 2, %s26
          %s218 = smul.u32 2, %s216
          %s220 = ssub.s32 512, 512
          %221 = vsyncadd %s211, %s220
          %s222 = smul.addr %s217, 4
          %s223 = sadd.s32 %s218, %s222
          %s224 = smul.addr %s223, 128
          %s225 = scalar_lea.hbm %s0, %s224
          %s226 = sshll.u32 %s214, 4
          %s227 = int_to_ptr.vmem [resolvable:$true] %s226
          %232 = dma.hbm_to_vmem [thread:$0]  %s225, 512, %s227, %s211, 512, 256, 16
        $region24: #{tpu_custom_call.1} parent=19 // pred_fallthru
          _
        // Predicated region
        $region25: #{tpu_custom_call.1} parent=19 // pred_check
          %p233 = pneg %p91
        $region26: #{tpu_custom_call.1} parent=19 // pred_check_branch
          %235 = sbr.rel (%p233) target = $region28
        $region27: #{tpu_custom_call.1} parent=19 // pred_region
          %s236 = sand.u32 %s19, 1
          %s237 = scalar_lea.sflag [#allocation6], %s236
          %s238 = sand.u32 %s81, 1
          %s239 = smul.addr %s238, 32
          %s240 = scalar_lea.vmem [#allocation5], %s239
          %s241 = ssub.s32 %s27, 2
          %p242 = scmp.gt.s32.totalorder %s241, 0
          %s243 = scalar_select %p242, %s241, 0
          %s244 = smul.u32 2, %s26
          %s245 = smul.u32 2, %s243
          %s247 = ssub.s32 512, 512
          %248 = vsyncadd %s237, %s247
          %s249 = smul.addr %s244, 2
          %s250 = sadd.s32 %s245, %s249
          %s251 = smul.addr %s250, 128
          %s252 = scalar_lea.hbm %s1, %s251
          %s253 = sshll.u32 %s240, 4
          %s254 = int_to_ptr.vmem [resolvable:$true] %s253
          %259 = dma.hbm_to_vmem [thread:$0]  %s252, 512, %s254, %s237, 256, 256, 16
        $region28: #{tpu_custom_call.1} parent=19 // pred_fallthru
          _
        // Predicated region
        $region29: #{tpu_custom_call.1} parent=19 // pred_check
          %p260 = pneg %p119
        $region30: #{tpu_custom_call.1} parent=19 // pred_check_branch
          %262 = sbr.rel (%p260) target = $region32
        $region31: #{tpu_custom_call.1} parent=19 // pred_region
          %s263 = sand.u32 %s19, 1
          %s264 = scalar_lea.sflag [#allocation6], %s263
          %s265 = sand.u32 %s109, 1
          %s266 = smul.addr %s265, 32
          %s267 = scalar_lea.vmem [#allocation7], %s266
          %s268 = smul.u32 2, %s26
          %s269 = smul.u32 2, %s27
          %s271 = ssub.s32 512, 512
          %272 = vsyncadd %s264, %s271
          %s273 = smul.addr %s268, 6
          %s274 = sadd.s32 %s269, %s273
          %s275 = smul.addr %s274, 128
          %s276 = scalar_lea.hbm %s2, %s275
          %s277 = sshll.u32 %s267, 4
          %s278 = int_to_ptr.vmem [resolvable:$true] %s277
          %283 = dma.hbm_to_vmem [thread:$0]  %s276, 512, %s278, %s264, 768, 256, 16
        $region32: #{tpu_custom_call.1} parent=19 // pred_fallthru
          _
      $region20: #{tpu_custom_call.1} parent=5 // pred_fallthru
        _
      %p284 = scmp.le.s32.totalorder 1, %s19
      %p285 = scmp.lt.s32.totalorder %s19, 4
      %p286 = pnand %p284, %p285
      %p287 = pneg %p286
      // Predicated region
      $region33: #{tpu_custom_call.1} parent=5 // pred_check
        _
      $region34: #{tpu_custom_call.1} parent=5 // pred_check_branch
        %289 = sbr.rel (%p286) target = $region36
      $region35: #{tpu_custom_call.1} parent=5 // pred_region
        %s290 = ssub.s32 %s19, 1
        %s291 = sand.u32 %s50, 1
        %s292 = scalar_lea.sflag [#allocation3], %s291
        %s293 = sand.u32 %s50, 1
        %s294 = smul.addr %s293, 32
        %s295 = scalar_lea.vmem [#allocation2], %s294
        // Predicated region
        $region37: #{tpu_custom_call.1} parent=35 // pred_check
          %p296 = pneg %p63
        $region38: #{tpu_custom_call.1} parent=35 // pred_check_branch
          %298 = sbr.rel (%p296) target = $region40
        $region39: #{tpu_custom_call.1} parent=35 // pred_region
          %299 = dma.done %s292, 512
        $region40: #{tpu_custom_call.1} parent=35 // pred_fallthru
          _
        %s300 = sand.u32 %s24, 1
        %s301 = scalar_lea.sflag [#allocation6], %s300
        %s302 = sand.u32 %s84, 1
        %s303 = smul.addr %s302, 32
        %s304 = scalar_lea.vmem [#allocation5], %s303
        // Predicated region
        $region41: #{tpu_custom_call.1} parent=35 // pred_check
          %p305 = pneg %p97
        $region42: #{tpu_custom_call.1} parent=35 // pred_check_branch
          %307 = sbr.rel (%p305) target = $region44
        $region43: #{tpu_custom_call.1} parent=35 // pred_region
          %308 = dma.done %s301, 512
        $region44: #{tpu_custom_call.1} parent=35 // pred_fallthru
          _
        %s309 = sand.u32 %s24, 1
        %s310 = scalar_lea.sflag [#allocation6], %s309
        %s311 = sand.u32 %s112, 1
        %s312 = smul.addr %s311, 32
        %s313 = scalar_lea.vmem [#allocation7], %s312
        // Predicated region
        $region45: #{tpu_custom_call.1} parent=35 // pred_check
          %p314 = pneg %p125
        $region46: #{tpu_custom_call.1} parent=35 // pred_check_branch
          %316 = sbr.rel (%p314) target = $region48
        $region47: #{tpu_custom_call.1} parent=35 // pred_region
          %317 = dma.done %s310, 512
        $region48: #{tpu_custom_call.1} parent=35 // pred_fallthru
          _
        %s318 = sand.u32 %s50, 1
        %s319 = scalar_lea.sflag [#allocation3], %s318
        %s320 = sand.u32 %s50, 1
        %s321 = smul.addr %s320, 32
        %s322 = scalar_lea.vmem [#allocation2], %s321
        %p323 = pneg %p63
        %p324 = pneg %p60
        %s325 = sand.u32 %s24, 1
        %s326 = scalar_lea.sflag [#allocation6], %s325
        %s327 = sand.u32 %s84, 1
        %s328 = smul.addr %s327, 32
        %s329 = scalar_lea.vmem [#allocation5], %s328
        %p330 = pneg %p97
        %p331 = pneg %p94
        %s332 = sand.u32 %s24, 1
        %s333 = scalar_lea.sflag [#allocation6], %s332
        %s334 = sand.u32 %s112, 1
        %s335 = smul.addr %s334, 32
        %s336 = scalar_lea.vmem [#allocation7], %s335
        %p337 = pneg %p125
        %p338 = pneg %p122
        %s339 = smul.u32 2, %s28
        %p340 = scmp.lt.s32.totalorder %s339, 1
        %s341 = scalar_select %p340, %s339, 1
        %s342 = smul.addr %s341, 8
        %s343 = scalar_lea.vmem %s3, %s342
        %p344 = pneg %p151
        %p345 = pneg %p148
        %p346 = pneg %p179
        %p347 = pneg %p176
        %s348 = sand.u32 %s166, 1
        %s349 = scalar_lea.sflag [#allocation4], %s348
        %s350 = sand.u32 %s166, 1
        %s351 = smul.addr %s350, 32
        %s352 = scalar_lea.vmem [#allocation8], %s351
        %p353 = scmp.lt.s32.totalorder %s29, 1
        %s354 = scalar_select %p353, %s29, 1
        %s355 = smul.u32 2, %s28
        %s356 = smul.u32 2, %s354
        %s357 = ssub.s32 %s29, 2
        %p358 = scmp.gt.s32.totalorder %s357, 0
        %s359 = scalar_select %p358, %s357, 0
        %s360 = smul.u32 2, %s28
        %s361 = smul.u32 2, %s359
        %s362 = smul.u32 2, %s28
        %s363 = smul.u32 2, %s29
        %s364 = smul.u32 2, %s28
        %p365 = scmp.lt.s32.totalorder %s364, 1
        %s366 = scalar_select %p365, %s364, 1
        %s367 = smul.addr %s366, 8
        %s368 = scalar_lea.vmem %s3, %s367
        %s369 = smul.u32 2, %s28
        %s370 = smul.u32 2, %s28
        %s371 = smul.u32 2, %s29
        %v372 = vld [vmem:[%s313] sm:$0xff]
        %v373 = vld [vmem:[%s313 + $0x8] sm:$0xff]
        %v374 = vld [vmem:[%s313 + $0x10] sm:$0xff]
        %v375 = vld [vmem:[%s313 + $0x18] sm:$0xff]
        %v376 = vld [vmem:[%s368] sm:$0xff]
        %v377 = vld [vmem:[%s368 + $0x8] sm:$0xff]
        %p378 = scmp.lt.s32.totalorder %s29, 2
        // Predicated region
        $region49: #{tpu_custom_call.1} parent=35 // pred_check
          %p379 = pneg %p378
        $region50: #{tpu_custom_call.1} parent=35 // pred_check_branch
          %381 = sbr.rel (%p379) target = $region52
        $region51: #{tpu_custom_call.1} parent=35 // pred_region
          %v382 = vld [vmem:[%s295] sm:$0xff]
          %v383 = vld [vmem:[%s295 + $0x8] sm:$0xff]
          %v384 = vld [vmem:[%s295 + $0x10] sm:$0xff]
          %v385 = vld [vmem:[%s295 + $0x18] sm:$0xff]
          %v386 = vadd.f32 %v382, %v372
          %v387 = vadd.f32 %v383, %v373
          %v388 = vadd.f32 %v384, %v374
          %v389 = vadd.f32 %v385, %v375
          %v390 = vtanh.pop %v386
          %v391 = vtanh.pop %v387
          %v392 = vtanh.pop %v388
          %v393 = vtanh.pop %v389
          %395 = vset.pattern.permute.xlu0 0
          %396 = vperm.xlu0 %395, %v376
          %v397 = vpop.permute.xlu0 %396
          %400 = vset.pattern.permute.xlu0 0
          %401 = vperm.xlu0 %400, %v377
          %v402 = vpop.permute.xlu0 %401
          %v404 = vadd.f32 %v390, %v397
          %v405 = vadd.f32 %v391, %v397
          %v406 = vadd.f32 %v392, %v402
          %v407 = vadd.f32 %v393, %v402
          %408 = vst [vmem:[%s352] sm:$0xff] %v404
          %409 = vst [vmem:[%s352 + $0x8] sm:$0xff] %v405
          %410 = vst [vmem:[%s352 + $0x10] sm:$0xff] %v406
          %411 = vst [vmem:[%s352 + $0x18] sm:$0xff] %v407
        $region52: #{tpu_custom_call.1} parent=35 // pred_fallthru
          _
        %p412 = scmp.ge.s32.totalorder %s29, 2
        // Predicated region
        $region53: #{tpu_custom_call.1} parent=35 // pred_check
          %p413 = pneg %p412
        $region54: #{tpu_custom_call.1} parent=35 // pred_check_branch
          %415 = sbr.rel (%p413) target = $region56
        $region55: #{tpu_custom_call.1} parent=35 // pred_region
          %v416 = vld [vmem:[%s304] sm:$0xff]
          %v417 = vld [vmem:[%s304 + $0x8] sm:$0xff]
          %v418 = vld [vmem:[%s304 + $0x10] sm:$0xff]
          %v419 = vld [vmem:[%s304 + $0x18] sm:$0xff]
          %v420 = vadd.f32 %v416, %v372
          %v421 = vadd.f32 %v417, %v373
          %v422 = vadd.f32 %v418, %v374
          %v423 = vadd.f32 %v419, %v375
          %v424 = vtanh.pop %v420
          %v425 = vtanh.pop %v421
          %v426 = vtanh.pop %v422
          %v427 = vtanh.pop %v423
          %429 = vset.pattern.permute.xlu0 0
          %430 = vperm.xlu0 %429, %v376
          %v431 = vpop.permute.xlu0 %430
          %434 = vset.pattern.permute.xlu0 0
          %435 = vperm.xlu0 %434, %v377
          %v436 = vpop.permute.xlu0 %435
          %v438 = vadd.f32 %v424, %v431
          %v439 = vadd.f32 %v425, %v431
          %v440 = vadd.f32 %v426, %v436
          %v441 = vadd.f32 %v427, %v436
          %442 = vst [vmem:[%s352] sm:$0xff] %v438
          %443 = vst [vmem:[%s352 + $0x8] sm:$0xff] %v439
          %444 = vst [vmem:[%s352 + $0x10] sm:$0xff] %v440
          %445 = vst [vmem:[%s352 + $0x18] sm:$0xff] %v441
        $region56: #{tpu_custom_call.1} parent=35 // pred_fallthru
          _
        %s446 = sand.u32 %s166, 1
        %s447 = scalar_lea.sflag [#allocation4], %s446
        %s448 = sand.u32 %s166, 1
        %s449 = smul.addr %s448, 32
        %s450 = scalar_lea.vmem [#allocation8], %s449
        // Predicated region
        $region57: #{tpu_custom_call.1} parent=35 // pred_check
          %p451 = pneg %p176
        $region58: #{tpu_custom_call.1} parent=35 // pred_check_branch
          %453 = sbr.rel (%p451) target = $region60
        $region59: #{tpu_custom_call.1} parent=35 // pred_region
          %s454 = smul.u32 2, %s28
          %s455 = smul.u32 2, %s29
          %s457 = ssub.s32 512, 512
          %458 = vsyncadd %s447, %s457
          %s459 = smul.addr %s454, 6
          %s460 = sadd.s32 %s455, %s459
          %s461 = smul.addr %s460, 128
          %s462 = scalar_lea.hbm %s4, %s461
          %s463 = sshll.u32 %s450, 4
          %s464 = int_to_ptr.vmem [resolvable:$true] %s463
          %469 = dma.vmem_to_hbm [thread:$0]  %s464, 512, %s462, %s447, 256, 768, 16
        $region60: #{tpu_custom_call.1} parent=35 // pred_fallthru
          _
      $region36: #{tpu_custom_call.1} parent=5 // pred_fallthru
        _
      %p470 = scmp.le.s32.totalorder 2, %s19
      // Predicated region
      $region61: #{tpu_custom_call.1} parent=5 // pred_check
        %p471 = pneg %p470
      $region62: #{tpu_custom_call.1} parent=5 // pred_check_branch
        %473 = sbr.rel (%p471) target = $region64
      $region63: #{tpu_custom_call.1} parent=5 // pred_region
        %s474 = ssub.s32 %s19, 2
        // Predicated region
        $region65: #{tpu_custom_call.1} parent=63 // pred_check
          %p475 = pneg %p182
        $region66: #{tpu_custom_call.1} parent=63 // pred_check_branch
          %477 = sbr.rel (%p475) target = $region68
        $region67: #{tpu_custom_call.1} parent=63 // pred_region
          %s478 = sand.u32 %s167, 1
          %s479 = scalar_lea.sflag [#allocation4], %s478
          %s480 = sand.u32 %s167, 1
          %s481 = smul.addr %s480, 32
          %s482 = scalar_lea.vmem [#allocation8], %s481
          %483 = dma.done %s479, 512
        $region68: #{tpu_custom_call.1} parent=63 // pred_fallthru
          _
      $region64: #{tpu_custom_call.1} parent=5 // pred_fallthru
        _
    $region6: #{tpu_custom_call.1} parent=1 // loop_footer
      %s23 = sadd.s32 1, %s19
    $region7: #{tpu_custom_call.1} parent=1 // loop_footer_branch
      %18 = sbr.rel target = $region3
    $region8: #{tpu_custom_call.1} parent=1 // loop_exit
      _
    %484 = vsyncpa [#allocation3], 1
    %s485 = scalar_lea.sflag [#allocation3], 1
    %486 = vsyncpa %s485, 1
    %487 = vsyncpa [#allocation6], 1
    %s488 = scalar_lea.sflag [#allocation6], 1
    %489 = vsyncpa %s488, 1
    %490 = vsyncpa [#allocation4], 1
    %s491 = scalar_lea.sflag [#allocation4], 1
    %492 = vsyncpa %s491, 1

</llo_original>
